<compile_context>
chip_gen: v5e
topology: v5e:2x2
jax: 0.10.0
libtpu: 0.0.40
codegen_flags: <defaults>
</compile_context>

<pallas_src>
import functools

import jax
import jax.numpy as jnp
from jax.experimental import pallas as pl
from jax.experimental.pallas import tpu as pltpu

LANE = 128


def _round_up(n, m):
    return ((n + m - 1) // m) * m


# ------------------------- fused conv + recognition ------------------------ #
def _fused_kernel(patches_ref, wconv_ref, bconv_ref, wcls_ref, bcls_ref,
                  seq_ref, score_ref, *, H, W, W_pad, NC_pad):
    """One batch element per grid step.

    patches_ref: (1, H*W, 9*Cin)  bf16   im2col patches
    wconv_ref:   (9*Cin, Cout)    bf16   conv weight, pre-reshaped
    bconv_ref:   (1, Cout)        f32
    wcls_ref:    (Cout, NC_pad)   bf16   classifier, classes padded to 128
    bcls_ref:    (1, NC_pad)      f32    padded entries = -1e30
    seq_ref:     (1, 1, W_pad)    int32  lane-dense output row
    score_ref:   (1, 1, W_pad)    f32    lane-dense output row
    """
    p = patches_ref[0]                                    # (H*W, 9*Cin)
    cout = wconv_ref.shape[-1]

    # --- conv as a single im2col matmul (K = 9*Cin), f32 accumulation ---
    acc = jnp.dot(p, wconv_ref[...], preferred_element_type=jnp.float32)
    acc = jnp.maximum(acc + bconv_ref[0], 0.0)            # bias + ReLU, (H*W, Cout)

    # --- mean pool over H (reduction over the leading axis => tile adds) ---
    feat = acc.reshape(H, W, cout)
    pooled = jnp.mean(feat, axis=0)                       # (W, Cout) f32

    # --- classifier: lane-dense NC_pad logits ---
    logits = jnp.dot(pooled.astype(wcls_ref.dtype), wcls_ref[...],
                     preferred_element_type=jnp.float32) + bcls_ref[0]  # (W, NC_pad)

    # softmax prob of the argmax class = 1 / sum(exp(logit - max))
    m = jnp.max(logits, axis=-1, keepdims=True)           # (W, 1) f32
    denom = jnp.sum(jnp.exp(logits - m), axis=-1, keepdims=True)
    score = 1.0 / denom                                   # (W, 1)

    # first argmax (f32 == f32 on the same values -> exact)
    lane = jax.lax.broadcasted_iota(jnp.int32, logits.shape, 1)
    idx = jnp.min(jnp.where(logits == m, lane, jnp.int32(NC_pad)),
                  axis=-1, keepdims=True)                 # (W, 1) int32

    # --- lane-dense output rows: real results in lanes [0, W) ---
    seq_row = idx.reshape(1, W)
    score_row = score.reshape(1, W)
    if W_pad > W:
        seq_row = jnp.concatenate(
            [seq_row, jnp.zeros((1, W_pad - W), jnp.int32)], axis=-1)
        score_row = jnp.concatenate(
            [score_row, jnp.zeros((1, W_pad - W), jnp.float32)], axis=-1)
    seq_ref[0] = seq_row
    score_ref[0] = score_row


# --------------------------------- wrapper --------------------------------- #
def model_forward(image_nchw, params):
    """Eval-mode Model.forward: returns (seq, seq_score)."""
    x = jnp.transpose(image_nchw, (0, 2, 3, 1))           # NCHW -> NHWC
    B, H, W, Cin = x.shape
    Cout = params["conv_w"].shape[-1]
    NC = params["cls_w"].shape[-1]
    K9 = 9 * Cin
    NC_pad = _round_up(NC, LANE)
    W_pad = _round_up(W, LANE)

    # im2col in the wrapper (pure layout plumbing; tiny at these shapes).
    # TODO(synk): for production-size feature maps, build the 9-tap concat
    # inside a row-tiled kernel instead of materializing patches in HBM.
    xp = jnp.pad(x, ((0, 0), (1, 1), (1, 1), (0, 0)))
    cols = [xp[:, kh:kh + H, kw:kw + W, :] for kh in range(3) for kw in range(3)]
    patches = (jnp.concatenate(cols, axis=-1)
               .reshape(B, H * W, K9).astype(jnp.bfloat16))

    wconv = params["conv_w"].reshape(K9, Cout).astype(jnp.bfloat16)
    bconv = params["conv_b"].reshape(1, Cout).astype(jnp.float32)

    # Pad classifier to 128 classes; padded bias = -1e30 so padded lanes can
    # never win the argmax or contribute to the softmax denominator.
    wcls = jnp.zeros((Cout, NC_pad), jnp.bfloat16)
    wcls = wcls.at[:, :NC].set(params["cls_w"].astype(jnp.bfloat16))
    bcls = jnp.full((1, NC_pad), -1e30, jnp.float32)
    bcls = bcls.at[:, :NC].set(params["cls_b"].astype(jnp.float32))

    kernel = functools.partial(_fused_kernel, H=H, W=W, W_pad=W_pad,
                               NC_pad=NC_pad)
    seq_p, score_p = pl.pallas_call(
        kernel,
        out_shape=(
            jax.ShapeDtypeStruct((B, 1, W_pad), jnp.int32),
            jax.ShapeDtypeStruct((B, 1, W_pad), jnp.float32),
        ),
        grid=(B,),
        in_specs=[
            pl.BlockSpec((1, H * W, K9), lambda b: (b, 0, 0)),
            pl.BlockSpec((K9, Cout), lambda b: (0, 0)),
            pl.BlockSpec((1, Cout), lambda b: (0, 0)),
            pl.BlockSpec((Cout, NC_pad), lambda b: (0, 0)),
            pl.BlockSpec((1, NC_pad), lambda b: (0, 0)),
        ],
        out_specs=(
            pl.BlockSpec((1, 1, W_pad), lambda b: (b, 0, 0)),
            pl.BlockSpec((1, 1, W_pad), lambda b: (b, 0, 0)),
        ),
        compiler_params=pltpu.CompilerParams(
            dimension_semantics=("parallel",),
            vmem_limit_bytes=32 * 1024 * 1024),
    )(patches, wconv, bconv, wcls, bcls)

    seq = seq_p[:, 0, :W]
    seq_score = score_p[:, 0, :W]
    return seq, seq_score
    # TODO(synk): the training branch (CTC/attention loss against `target`)
    # of recog.Recogniton has no clean single-kernel equivalent and is omitted.


def init_params(key, cin, cout, num_classes):
    k1, k2, k3, k4 = jax.random.split(key, 4)
    return {
        "conv_w": 0.1 * jax.random.normal(k1, (3, 3, cin, cout), jnp.float32),
        "conv_b": 0.1 * jax.random.normal(k2, (cout,), jnp.float32),
        "cls_w": 0.1 * jax.random.normal(k3, (cout, num_classes), jnp.float32),
        "cls_b": 0.1 * jax.random.normal(k4, (num_classes,), jnp.float32),
    }


if __name__ == "__main__":
    B, Cin, H, W = 2, 4, 16, 16
    Cout, NUM_CLASSES = 32, 37   # e.g. 26 letters + 10 digits + blank

    key = jax.random.PRNGKey(0)
    pkey, xkey = jax.random.split(key)
    params = init_params(pkey, Cin, Cout, NUM_CLASSES)
    image = jax.random.normal(xkey, (B, Cin, H, W), jnp.float32)  # NCHW input

    seq, seq_score = jax.jit(model_forward)(image, params)
    jax.block_until_ready((seq, seq_score))

    assert seq.shape == (B, W) and seq.dtype == jnp.int32
    assert seq_score.shape == (B, W) and seq_score.dtype == jnp.float32
    assert bool(jnp.all(seq >= 0)) and bool(jnp.all(seq < NUM_CLASSES))
    assert bool(jnp.all(seq_score > 0.0)) and bool(jnp.all(seq_score <= 1.0))
    print("KERNEL_OK")
</pallas_src>

<mosaic_0001>
module attributes {stable_mosaic.version = 11 : i64} {
  func.func @_fused_kernel(%arg0: i32, %arg1: memref<1x256x36xbf16, #tpu.memory_space<vmem>>, %arg2: memref<36x32xbf16, #tpu.memory_space<vmem>>, %arg3: memref<1x32xf32, #tpu.memory_space<vmem>>, %arg4: memref<32x128xbf16, #tpu.memory_space<vmem>>, %arg5: memref<1x128xf32, #tpu.memory_space<vmem>>, %arg6: memref<1x1x128xi32, #tpu.memory_space<vmem>>, %arg7: memref<1x1x128xf32, #tpu.memory_space<vmem>>) attributes {dimension_semantics = [#tpu.dimension_semantics<parallel>], iteration_bounds = array<i64: 2>, scalar_prefetch = 0 : i64, scratch_operands = 0 : i64, tpu.core_type = #tpu.core_type<tc>, window_params = [{transform_indices = @transform_0, window_bounds = array<i64: 1, 256, 36>}, {pipeline_mode = #tpu.pipeline_mode<synchronous>, transform_indices = @transform_1, window_bounds = array<i64: 36, 32>}, {pipeline_mode = #tpu.pipeline_mode<synchronous>, transform_indices = @transform_2, window_bounds = array<i64: 1, 32>}, {pipeline_mode = #tpu.pipeline_mode<synchronous>, transform_indices = @transform_3, window_bounds = array<i64: 32, 128>}, {pipeline_mode = #tpu.pipeline_mode<synchronous>, transform_indices = @transform_4, window_bounds = array<i64: 1, 128>}, {transform_indices = @transform_5, window_bounds = array<i64: 1, 1, 128>}, {transform_indices = @transform_6, window_bounds = array<i64: 1, 1, 128>}]} {
    %c0 = arith.constant 0 : index
    %c0_0 = arith.constant 0 : index
    %c0_1 = arith.constant 0 : index
    %0 = vector.load %arg1[%c0, %c0_0, %c0_1] : memref<1x256x36xbf16, #tpu.memory_space<vmem>>, vector<1x256x36xbf16>
    %1 = vector.shape_cast %0 : vector<1x256x36xbf16> to vector<256x36xbf16>
    %c0_2 = arith.constant 0 : index
    %c0_3 = arith.constant 0 : index
    %2 = vector.load %arg2[%c0_2, %c0_3] : memref<36x32xbf16, #tpu.memory_space<vmem>>, vector<36x32xbf16>
    %cst = arith.constant dense<0.000000e+00> : vector<256x32xf32>
    %3 = tpu.matmul %1, %2, %cst {dimension_numbers = #tpu.dot_dimension_numbers<[1], [0], [0], [1], [0, 0, 1, 1], [], []>} : vector<256x36xbf16>, vector<36x32xbf16>, vector<256x32xf32> -> vector<256x32xf32>
    %c0_4 = arith.constant 0 : index
    %c0_5 = arith.constant 0 : index
    %4 = vector.load %arg3[%c0_4, %c0_5] : memref<1x32xf32, #tpu.memory_space<vmem>>, vector<1x32xf32>
    %5 = vector.shape_cast %4 : vector<1x32xf32> to vector<32xf32>
    %6 = vector.shape_cast %5 : vector<32xf32> to vector<1x32xf32>
    %7 = vector.broadcast %6 : vector<1x32xf32> to vector<256x32xf32>
    %8 = arith.addf %3, %7 : vector<256x32xf32>
    %cst_6 = arith.constant 0.000000e+00 : f32
    %9 = vector.broadcast %cst_6 : f32 to vector<256x32xf32>
    %10 = arith.maximumf %8, %9 : vector<256x32xf32>
    %11 = vector.shape_cast %10 : vector<256x32xf32> to vector<16x16x32xf32>
    %cst_7 = arith.constant dense<0.000000e+00> : vector<16x32xf32>
    %12 = vector.multi_reduction <add>, %11, %cst_7 [0] : vector<16x16x32xf32> to vector<16x32xf32>
    %cst_8 = arith.constant 1.600000e+01 : f32
    %13 = vector.broadcast %cst_8 : f32 to vector<16x32xf32>
    %14 = arith.divf %12, %13 : vector<16x32xf32>
    %15 = arith.truncf %14 : vector<16x32xf32> to vector<16x32xbf16>
    %c0_9 = arith.constant 0 : index
    %c0_10 = arith.constant 0 : index
    %16 = vector.load %arg4[%c0_9, %c0_10] : memref<32x128xbf16, #tpu.memory_space<vmem>>, vector<32x128xbf16>
    %cst_11 = arith.constant dense<0.000000e+00> : vector<16x128xf32>
    %17 = tpu.matmul %15, %16, %cst_11 {dimension_numbers = #tpu.dot_dimension_numbers<[1], [0], [0], [1], [0, 0, 1, 1], [], []>} : vector<16x32xbf16>, vector<32x128xbf16>, vector<16x128xf32> -> vector<16x128xf32>
    %c0_12 = arith.constant 0 : index
    %c0_13 = arith.constant 0 : index
    %18 = vector.load %arg5[%c0_12, %c0_13] : memref<1x128xf32, #tpu.memory_space<vmem>>, vector<1x128xf32>
    %19 = vector.shape_cast %18 : vector<1x128xf32> to vector<128xf32>
    %20 = vector.shape_cast %19 : vector<128xf32> to vector<1x128xf32>
    %21 = vector.broadcast %20 : vector<1x128xf32> to vector<16x128xf32>
    %22 = arith.addf %17, %21 : vector<16x128xf32>
    %cst_14 = arith.constant dense<0xFF800000> : vector<16xf32>
    %23 = vector.multi_reduction <maximumf>, %22, %cst_14 [1] : vector<16x128xf32> to vector<16xf32>
    %24 = vector.shape_cast %23 : vector<16xf32> to vector<16x1xf32>
    %25 = vector.broadcast %24 : vector<16x1xf32> to vector<16x128xf32>
    %26 = arith.subf %22, %25 : vector<16x128xf32>
    %27 = math.exp %26 : vector<16x128xf32>
    %cst_15 = arith.constant dense<0.000000e+00> : vector<16xf32>
    %28 = vector.multi_reduction <add>, %27, %cst_15 [1] : vector<16x128xf32> to vector<16xf32>
    %29 = vector.shape_cast %28 : vector<16xf32> to vector<16x1xf32>
    %cst_16 = arith.constant 1.000000e+00 : f32
    %30 = vector.broadcast %cst_16 : f32 to vector<16x1xf32>
    %31 = arith.divf %30, %29 : vector<16x1xf32>
    %32 = tpu.iota {dimensions = array<i32: 1>} : vector<16x128xi32>
    %33 = vector.broadcast %24 : vector<16x1xf32> to vector<16x128xf32>
    %34 = arith.cmpf oeq, %22, %33 : vector<16x128xf32>
    %c128_i32 = arith.constant 128 : i32
    %35 = vector.broadcast %c128_i32 : i32 to vector<16x128xi32>
    %36 = arith.select %34, %32, %35 : vector<16x128xi1>, vector<16x128xi32>
    %cst_17 = arith.constant dense<2147483647> : vector<16xi32>
    %37 = vector.multi_reduction <minsi>, %36, %cst_17 [1] : vector<16x128xi32> to vector<16xi32>
    %38 = vector.shape_cast %37 : vector<16xi32> to vector<16x1xi32>
    %39 = vector.shape_cast %38 : vector<16x1xi32> to vector<1x16xi32>
    %40 = vector.shape_cast %31 : vector<16x1xf32> to vector<1x16xf32>
    %c0_i32 = arith.constant 0 : i32
    %41 = vector.broadcast %c0_i32 : i32 to vector<1x112xi32>
    %42 = tpu.concatenate %39, %41 in 1 : vector<1x16xi32>, vector<1x112xi32> -> vector<1x128xi32>
    %cst_18 = arith.constant 0.000000e+00 : f32
    %43 = vector.broadcast %cst_18 : f32 to vector<1x112xf32>
    %44 = tpu.concatenate %40, %43 in 1 : vector<1x16xf32>, vector<1x112xf32> -> vector<1x128xf32>
    %c0_19 = arith.constant 0 : index
    %c0_20 = arith.constant 0 : index
    %c0_21 = arith.constant 0 : index
    %45 = vector.load %arg6[%c0_19, %c0_20, %c0_21] : memref<1x1x128xi32, #tpu.memory_space<vmem>>, vector<1x1x128xi32>
    %46 = vector.shape_cast %45 : vector<1x1x128xi32> to vector<1x128xi32>
    %47 = vector.shape_cast %42 : vector<1x128xi32> to vector<1x1x128xi32>
    tpu.vector_store %arg6[%c0_19, %c0_20, %c0_21], %47 {strides = array<i32>} : memref<1x1x128xi32, #tpu.memory_space<vmem>>, vector<1x1x128xi32>,
    %c0_22 = arith.constant 0 : index
    %c0_23 = arith.constant 0 : index
    %c0_24 = arith.constant 0 : index
    %48 = vector.load %arg7[%c0_22, %c0_23, %c0_24] : memref<1x1x128xf32, #tpu.memory_space<vmem>>, vector<1x1x128xf32>
    %49 = vector.shape_cast %48 : vector<1x1x128xf32> to vector<1x128xf32>
    %50 = vector.shape_cast %44 : vector<1x128xf32> to vector<1x1x128xf32>
    tpu.vector_store %arg7[%c0_22, %c0_23, %c0_24], %50 {strides = array<i32>} : memref<1x1x128xf32, #tpu.memory_space<vmem>>, vector<1x1x128xf32>,
    return
  }
  func.func @transform_0(%arg0: i32) -> (i32, i32, i32) {
    %c0_i32 = arith.constant 0 : i32
    %c0_i32_0 = arith.constant 0 : i32
    %c0_i32_1 = arith.constant 0 : i32
    return %arg0, %c0_i32, %c0_i32_0 : i32, i32, i32
  }
  func.func @transform_1(%arg0: i32) -> (i32, i32) {
    %c0_i32 = arith.constant 0 : i32
    %c0_i32_0 = arith.constant 0 : i32
    %c0_i32_1 = arith.constant 0 : i32
    return %c0_i32, %c0_i32_0 : i32, i32
  }
  func.func @transform_2(%arg0: i32) -> (i32, i32) {
    %c0_i32 = arith.constant 0 : i32
    %c0_i32_0 = arith.constant 0 : i32
    %c0_i32_1 = arith.constant 0 : i32
    return %c0_i32, %c0_i32_0 : i32, i32
  }
  func.func @transform_3(%arg0: i32) -> (i32, i32) {
    %c0_i32 = arith.constant 0 : i32
    %c0_i32_0 = arith.constant 0 : i32
    %c0_i32_1 = arith.constant 0 : i32
    return %c0_i32, %c0_i32_0 : i32, i32
  }
  func.func @transform_4(%arg0: i32) -> (i32, i32) {
    %c0_i32 = arith.constant 0 : i32
    %c0_i32_0 = arith.constant 0 : i32
    %c0_i32_1 = arith.constant 0 : i32
    return %c0_i32, %c0_i32_0 : i32, i32
  }
  func.func @transform_5(%arg0: i32) -> (i32, i32, i32) {
    %c0_i32 = arith.constant 0 : i32
    %c0_i32_0 = arith.constant 0 : i32
    %c0_i32_1 = arith.constant 0 : i32
    return %arg0, %c0_i32, %c0_i32_0 : i32, i32, i32
  }
  func.func @transform_6(%arg0: i32) -> (i32, i32, i32) {
    %c0_i32 = arith.constant 0 : i32
    %c0_i32_0 = arith.constant 0 : i32
    %c0_i32_1 = arith.constant 0 : i32
    return %arg0, %c0_i32, %c0_i32_0 : i32, i32, i32
  }
}

</mosaic_0001>

<llo_original>
// kernel: model_forward.1
$region0: #{model_forward.1}
  #allocation0 [shape = 'u32[]', space=smem, size = 0x4, offset = 0x4, fixed_abs, tag = 'smem constant byte address 0x4 - core index']
  #allocation1 [shape = 'u32[72,128]{1,0:T(1,128)}', space=vmem, size = 0x9000, scoped, tag = 'internal scratch']
  %s0 = inlined_call_operand.vmem [shape: bf16[2,256,36], index: 0, kind: input, shape index: {}]
  %s1 = inlined_call_operand.vmem [shape: bf16[36,32], index: 1, kind: input, shape index: {}]
  %s2 = inlined_call_operand.vmem [shape: f32[1,32], index: 2, kind: input, shape index: {}]
  %s3 = inlined_call_operand.vmem [shape: bf16[32,128], index: 3, kind: input, shape index: {}]
  %s4 = inlined_call_operand.vmem [shape: f32[1,128], index: 4, kind: input, shape index: {}]
  %s5 = inlined_call_operand.hbm [shape: s32[2,1,128], index: 5, kind: output, shape index: {0}]
  %s6 = inlined_call_operand.hbm [shape: f32[2,1,128], index: 6, kind: output, shape index: {1}]
  %7 = xla_tuple %s5, %s6
  %s8 = sld [smem:[#allocation0]]
  $region61: #{model_forward.1} parent=0
    _
  %s10 = ssub.s32 1, %s8
  %s11 = scalar_select 0, %s10, %s8
  $region1: #{model_forward.1} parent=0
    #allocation2 [shape = 'u8[1024]{0}', space=vmem, size = 0x400, scoped, tag = 'output window, operand 0']
    #allocation3 [shape = 's32[2]{0}', space=sflag, size = 0x8, scoped, tag = 'scoped memory for model_forward.1']
    #allocation4 [shape = 'u8[1024]{0}', space=vmem, size = 0x400, scoped, tag = 'output window, operand 1']
    #allocation5 [shape = 's32[2]{0}', space=sflag, size = 0x8, scoped, tag = 'scoped memory for model_forward.1']
    %12 = vsyncpa [#allocation3], 0
    %s13 = scalar_lea.sflag [#allocation3], 1
    %14 = vsyncpa %s13, 0
    %15 = vsyncpa [#allocation5], 0
    %s16 = scalar_lea.sflag [#allocation5], 1
    %17 = vsyncpa %s16, 0
    loop: start=0, step=1, limit=4
    $region2: #{model_forward.1} parent=1 // loop_pre_header
      _
    $region3: #{model_forward.1} parent=1 // loop_header
      %s19 = sphi 0, %s23
      %p20 = scmp.ge.s32.totalorder %s19, 4
      %s29 = sphi 0, %s31
      %s32 = sphi 0, %s29
      %s33 = sphi 0, %s32
      %s49 = sphi 0, %s33
      %s53 = sphi 0, %s53
      %s55 = sphi 0, %s53
      %s56 = sphi 0, %s55
      %s70 = sphi 0, %s56
      %s74 = sphi 0, %s74
      %s76 = sphi 0, %s74
      %s77 = sphi 0, %s76
      %s91 = sphi 0, %s77
      %s95 = sphi 0, %s95
      %s97 = sphi 0, %s95
      %s98 = sphi 0, %s97
      %s112 = sphi 0, %s98
      %s116 = sphi 0, %s116
      %s118 = sphi 0, %s116
      %s119 = sphi 0, %s118
      %s133 = sphi 0, %s119
      %s139 = sphi 0, %s141
      %s142 = sphi 0, %s139
      %s143 = sphi 0, %s142
      %s159 = sphi 0, %s143
      %s165 = sphi 0, %s167
      %s168 = sphi 0, %s165
      %s169 = sphi 0, %s168
      %s185 = sphi 0, %s169
    $region4: #{model_forward.1} parent=1 // loop_header_branch
      %22 = sbr.rel (%p20) target = $region8
    $region5: #{model_forward.1} parent=1 // loop_body
      %s24 = ssub.s32 %s19, 1
      %s25 = ssub.s32 %s19, 2
      %s26 = sadd.s32 %s19, 1
      %s27 = ssub.s32 %s19, %s26
      %p28 = scmp.eq.s32.totalorder %s27, 0
      %s30 = sadd.s32 %s29, 1
      %s31 = scalar_select %p28, %s29, %s30
      %p34 = pneg %p28
      %p35 = scmp.eq.s32.totalorder %s19, 1
      %p36 = por %p34, %p35
      %p37 = scmp.ne.s32.totalorder %s29, %s32
      %p38 = scmp.eq.s32.totalorder %s19, 0
      %p39 = por %p37, %p38
      %p40 = scmp.ne.s32.totalorder %s29, %s32
      %p41 = scmp.eq.s32.totalorder %s24, 1
      %p42 = por %p40, %p41
      %p43 = scmp.ne.s32.totalorder %s32, %s33
      %p44 = scmp.eq.s32.totalorder %s24, 0
      %p45 = por %p43, %p44
      %p46 = scmp.ne.s32.totalorder %s32, %s33
      %p47 = scmp.eq.s32.totalorder %s25, 1
      %p48 = por %p46, %p47
      %p50 = scmp.ne.s32.totalorder %s33, %s49
      %p51 = scmp.eq.s32.totalorder %s25, 0
      %p52 = por %p50, %p51
      %s54 = sadd.s32 %s53, 1
      %p57 = scmp.eq.s32.totalorder %s19, 1
      %p58 = scmp.ne.s32.totalorder %s53, %s55
      %p59 = scmp.eq.s32.totalorder %s19, 0
      %p60 = por %p58, %p59
      %p61 = scmp.ne.s32.totalorder %s53, %s55
      %p62 = scmp.eq.s32.totalorder %s24, 1
      %p63 = por %p61, %p62
      %p64 = scmp.ne.s32.totalorder %s55, %s56
      %p65 = scmp.eq.s32.totalorder %s24, 0
      %p66 = por %p64, %p65
      %p67 = scmp.ne.s32.totalorder %s55, %s56
      %p68 = scmp.eq.s32.totalorder %s25, 1
      %p69 = por %p67, %p68
      %p71 = scmp.ne.s32.totalorder %s56, %s70
      %p72 = scmp.eq.s32.totalorder %s25, 0
      %p73 = por %p71, %p72
      %s75 = sadd.s32 %s74, 1
      %p78 = scmp.eq.s32.totalorder %s19, 1
      %p79 = scmp.ne.s32.totalorder %s74, %s76
      %p80 = scmp.eq.s32.totalorder %s19, 0
      %p81 = por %p79, %p80
      %p82 = scmp.ne.s32.totalorder %s74, %s76
      %p83 = scmp.eq.s32.totalorder %s24, 1
      %p84 = por %p82, %p83
      %p85 = scmp.ne.s32.totalorder %s76, %s77
      %p86 = scmp.eq.s32.totalorder %s24, 0
      %p87 = por %p85, %p86
      %p88 = scmp.ne.s32.totalorder %s76, %s77
      %p89 = scmp.eq.s32.totalorder %s25, 1
      %p90 = por %p88, %p89
      %p92 = scmp.ne.s32.totalorder %s77, %s91
      %p93 = scmp.eq.s32.totalorder %s25, 0
      %p94 = por %p92, %p93
      %s96 = sadd.s32 %s95, 1
      %p99 = scmp.eq.s32.totalorder %s19, 1
      %p100 = scmp.ne.s32.totalorder %s95, %s97
      %p101 = scmp.eq.s32.totalorder %s19, 0
      %p102 = por %p100, %p101
      %p103 = scmp.ne.s32.totalorder %s95, %s97
      %p104 = scmp.eq.s32.totalorder %s24, 1
      %p105 = por %p103, %p104
      %p106 = scmp.ne.s32.totalorder %s97, %s98
      %p107 = scmp.eq.s32.totalorder %s24, 0
      %p108 = por %p106, %p107
      %p109 = scmp.ne.s32.totalorder %s97, %s98
      %p110 = scmp.eq.s32.totalorder %s25, 1
      %p111 = por %p109, %p110
      %p113 = scmp.ne.s32.totalorder %s98, %s112
      %p114 = scmp.eq.s32.totalorder %s25, 0
      %p115 = por %p113, %p114
      %s117 = sadd.s32 %s116, 1
      %p120 = scmp.eq.s32.totalorder %s19, 1
      %p121 = scmp.ne.s32.totalorder %s116, %s118
      %p122 = scmp.eq.s32.totalorder %s19, 0
      %p123 = por %p121, %p122
      %p124 = scmp.ne.s32.totalorder %s116, %s118
      %p125 = scmp.eq.s32.totalorder %s24, 1
      %p126 = por %p124, %p125
      %p127 = scmp.ne.s32.totalorder %s118, %s119
      %p128 = scmp.eq.s32.totalorder %s24, 0
      %p129 = por %p127, %p128
      %p130 = scmp.ne.s32.totalorder %s118, %s119
      %p131 = scmp.eq.s32.totalorder %s25, 1
      %p132 = por %p130, %p131
      %p134 = scmp.ne.s32.totalorder %s119, %s133
      %p135 = scmp.eq.s32.totalorder %s25, 0
      %p136 = por %p134, %p135
      %s137 = ssub.s32 %s19, %s26
      %p138 = scmp.eq.s32.totalorder %s137, 0
      %s140 = sadd.s32 %s139, 1
      %s141 = scalar_select %p138, %s139, %s140
      %p144 = pneg %p138
      %p145 = scmp.eq.s32.totalorder %s19, 1
      %p146 = por %p144, %p145
      %p147 = scmp.ne.s32.totalorder %s139, %s142
      %p148 = scmp.eq.s32.totalorder %s19, 0
      %p149 = por %p147, %p148
      %p150 = scmp.ne.s32.totalorder %s139, %s142
      %p151 = scmp.eq.s32.totalorder %s24, 1
      %p152 = por %p150, %p151
      %p153 = scmp.ne.s32.totalorder %s142, %s143
      %p154 = scmp.eq.s32.totalorder %s24, 0
      %p155 = por %p153, %p154
      %p156 = scmp.ne.s32.totalorder %s142, %s143
      %p157 = scmp.eq.s32.totalorder %s25, 1
      %p158 = por %p156, %p157
      %p160 = scmp.ne.s32.totalorder %s143, %s159
      %p161 = scmp.eq.s32.totalorder %s25, 0
      %p162 = por %p160, %p161
      %s163 = ssub.s32 %s19, %s26
      %p164 = scmp.eq.s32.totalorder %s163, 0
      %s166 = sadd.s32 %s165, 1
      %s167 = scalar_select %p164, %s165, %s166
      %p170 = pneg %p164
      %p171 = scmp.eq.s32.totalorder %s19, 1
      %p172 = por %p170, %p171
      %p173 = scmp.ne.s32.totalorder %s165, %s168
      %p174 = scmp.eq.s32.totalorder %s19, 0
      %p175 = por %p173, %p174
      %p176 = scmp.ne.s32.totalorder %s165, %s168
      %p177 = scmp.eq.s32.totalorder %s24, 1
      %p178 = por %p176, %p177
      %p179 = scmp.ne.s32.totalorder %s168, %s169
      %p180 = scmp.eq.s32.totalorder %s24, 0
      %p181 = por %p179, %p180
      %p182 = scmp.ne.s32.totalorder %s168, %s169
      %p183 = scmp.eq.s32.totalorder %s25, 1
      %p184 = por %p182, %p183
      %p186 = scmp.ne.s32.totalorder %s169, %s185
      %p187 = scmp.eq.s32.totalorder %s25, 0
      %p188 = por %p186, %p187
      %p189 = scmp.le.s32.totalorder 1, %s19
      %p190 = scmp.lt.s32.totalorder %s19, 3
      %p191 = pnand %p189, %p190
      %p192 = pneg %p191
      // Predicated region
      $region9: #{model_forward.1} parent=5 // pred_check
        _
      $region10: #{model_forward.1} parent=5 // pred_check_branch
        %194 = sbr.rel (%p191) target = $region12
      $region11: #{model_forward.1} parent=5 // pred_region
        %s195 = ssub.s32 %s19, 1
        // Predicated region
        $region13: #{model_forward.1} parent=11 // pred_check
          %p196 = pneg %p66
        $region14: #{model_forward.1} parent=11 // pred_check_branch
          %198 = sbr.rel (%p196) target = $region16
        $region15: #{model_forward.1} parent=11 // pred_region
          _
        $region16: #{model_forward.1} parent=11 // pred_fallthru
          _
        // Predicated region
        $region17: #{model_forward.1} parent=11 // pred_check
          %p199 = pneg %p87
        $region18: #{model_forward.1} parent=11 // pred_check_branch
          %201 = sbr.rel (%p199) target = $region20
        $region19: #{model_forward.1} parent=11 // pred_region
          _
        $region20: #{model_forward.1} parent=11 // pred_fallthru
          _
        // Predicated region
        $region21: #{model_forward.1} parent=11 // pred_check
          %p202 = pneg %p108
        $region22: #{model_forward.1} parent=11 // pred_check_branch
          %204 = sbr.rel (%p202) target = $region24
        $region23: #{model_forward.1} parent=11 // pred_region
          _
        $region24: #{model_forward.1} parent=11 // pred_fallthru
          _
        // Predicated region
        $region25: #{model_forward.1} parent=11 // pred_check
          %p205 = pneg %p129
        $region26: #{model_forward.1} parent=11 // pred_check_branch
          %207 = sbr.rel (%p205) target = $region28
        $region27: #{model_forward.1} parent=11 // pred_region
          _
        $region28: #{model_forward.1} parent=11 // pred_fallthru
          _
      $region12: #{model_forward.1} parent=5 // pred_fallthru
        _
      %p208 = scmp.lt.s32.totalorder %s19, 2
      // Predicated region
      $region29: #{model_forward.1} parent=5 // pred_check
        %p209 = pneg %p208
      $region30: #{model_forward.1} parent=5 // pred_check_branch
        %211 = sbr.rel (%p209) target = $region32
      $region31: #{model_forward.1} parent=5 // pred_region
        // Predicated region
        $region33: #{model_forward.1} parent=31 // pred_check
          %p212 = pneg %p39
        $region34: #{model_forward.1} parent=31 // pred_check_branch
          %214 = sbr.rel (%p212) target = $region36
        $region35: #{model_forward.1} parent=31 // pred_region
          %p215 = scmp.lt.s32.totalorder %s19, 1
          %s216 = scalar_select %p215, %s19, 1
          %s217 = smul.addr %s216, 32
          %s218 = smul.addr %s217, 4
          %s219 = scalar_lea.vmem %s0, %s218
        $region36: #{model_forward.1} parent=31 // pred_fallthru
          _
      $region32: #{model_forward.1} parent=5 // pred_fallthru
        _
      %p220 = scmp.le.s32.totalorder 1, %s19
      %p221 = scmp.lt.s32.totalorder %s19, 3
      %p222 = pnand %p220, %p221
      %p223 = pneg %p222
      // Predicated region
      $region37: #{model_forward.1} parent=5 // pred_check
        _
      $region38: #{model_forward.1} parent=5 // pred_check_branch
        %225 = sbr.rel (%p222) target = $region40
      $region39: #{model_forward.1} parent=5 // pred_region
        %s226 = ssub.s32 %s19, 1
        %p227 = scmp.lt.s32.totalorder %s24, 1
        %s228 = scalar_select %p227, %s24, 1
        %s229 = smul.addr %s228, 32
        %s230 = smul.addr %s229, 4
        %s231 = scalar_lea.vmem %s0, %s230
        %p232 = pneg %p45
        %p233 = pneg %p42
        %p234 = pneg %p66
        %p235 = pneg %p63
        %p236 = pneg %p87
        %p237 = pneg %p84
        %p238 = pneg %p108
        %p239 = pneg %p105
        %p240 = pneg %p129
        %p241 = pneg %p126
        %p242 = pneg %p155
        %p243 = pneg %p152
        %s244 = sand.u32 %s142, 1
        %s245 = scalar_lea.sflag [#allocation3], %s244
        %s246 = sand.u32 %s142, 1
        %s247 = scalar_lea.vmem [#allocation2], %s246
        %p248 = pneg %p181
        %p249 = pneg %p178
        %s250 = sand.u32 %s168, 1
        %s251 = scalar_lea.sflag [#allocation5], %s250
        %s252 = sand.u32 %s168, 1
        %s253 = scalar_lea.vmem [#allocation4], %s252
        %p254 = scmp.lt.s32.totalorder %s24, 1
        %s255 = scalar_select %p254, %s24, 1
        %s256 = smul.addr %s255, 32
        %s257 = smul.addr %s256, 4
        %s258 = scalar_lea.vmem %s0, %s257
        %v260 = vld [vmem:[%s258] sm:$0xf]
        %v261 = vld [vmem:[%s258 + $0x4] sm:$0xf]
        %v262 = vld [vmem:[%s258 + $0x8] sm:$0xf]
        %v263 = vld [vmem:[%s258 + $0xc] sm:$0xf]
        %v264 = vld [vmem:[%s258 + $0x10] sm:$0xf]
        %v265 = vld [vmem:[%s258 + $0x14] sm:$0xf]
        %v266 = vld [vmem:[%s258 + $0x18] sm:$0xf]
        %v267 = vld [vmem:[%s258 + $0x1c] sm:$0xf]
        %v268 = vld [vmem:[%s258 + $0x20] sm:$0xf]
        %v269 = vld [vmem:[%s258 + $0x24] sm:$0xf]
        %v270 = vld [vmem:[%s258 + $0x28] sm:$0xf]
        %v271 = vld [vmem:[%s258 + $0x2c] sm:$0xf]
        %v272 = vld [vmem:[%s258 + $0x30] sm:$0xf]
        %v273 = vld [vmem:[%s258 + $0x34] sm:$0xf]
        %v274 = vld [vmem:[%s258 + $0x38] sm:$0xf]
        %v275 = vld [vmem:[%s258 + $0x3c] sm:$0xf]
        %v276 = vld [vmem:[%s258 + $0x40] sm:$0xf]
        %v277 = vld [vmem:[%s258 + $0x44] sm:$0xf]
        %v278 = vld [vmem:[%s258 + $0x48] sm:$0xf]
        %v279 = vld [vmem:[%s258 + $0x4c] sm:$0xf]
        %v280 = vld [vmem:[%s258 + $0x50] sm:$0xf]
        %v281 = vld [vmem:[%s258 + $0x54] sm:$0xf]
        %v282 = vld [vmem:[%s258 + $0x58] sm:$0xf]
        %v283 = vld [vmem:[%s258 + $0x5c] sm:$0xf]
        %v284 = vld [vmem:[%s258 + $0x60] sm:$0xf]
        %v285 = vld [vmem:[%s258 + $0x64] sm:$0xf]
        %v286 = vld [vmem:[%s258 + $0x68] sm:$0xf]
        %v287 = vld [vmem:[%s258 + $0x6c] sm:$0xf]
        %v288 = vld [vmem:[%s258 + $0x70] sm:$0xf]
        %v289 = vld [vmem:[%s258 + $0x74] sm:$0xf]
        %v290 = vld [vmem:[%s258 + $0x78] sm:$0xf]
        %v291 = vld [vmem:[%s258 + $0x7c] sm:$0xf]
        %v292 = vld [vmem:[%s1] sm:$0xf]
        %v293 = vld [vmem:[%s1 + $0x4] sm:$0xf]
        %v294 = vld [vmem:[%s1 + $0x8] sm:$0xf]
        %v295 = vld [vmem:[%s1 + $0xc] sm:$0xf]
        %v296 = vld [vmem:[%s1 + $0x10] sm:$0x3]
        %v297 = vld [vmem:[%s2] sm:$0x1]
        %v299 = vperm.slane %v297, 0
        %v333 = vunpack.c.l.b16 %v260
        %v334 = vunpack.c.l.b16 %v261
        %v335 = vunpack.c.l.b16 %v262
        %v336 = vunpack.c.l.b16 %v263
        %v337 = vunpack.c.l.b16 %v264
        %v338 = vunpack.c.l.b16 %v265
        %v339 = vunpack.c.l.b16 %v266
        %v340 = vunpack.c.l.b16 %v267
        %v341 = vunpack.c.l.b16 %v268
        %v342 = vunpack.c.l.b16 %v269
        %v343 = vunpack.c.l.b16 %v270
        %v344 = vunpack.c.l.b16 %v271
        %v345 = vunpack.c.l.b16 %v272
        %v346 = vunpack.c.l.b16 %v273
        %v347 = vunpack.c.l.b16 %v274
        %v348 = vunpack.c.l.b16 %v275
        %v349 = vunpack.c.l.b16 %v276
        %v350 = vunpack.c.l.b16 %v277
        %v351 = vunpack.c.l.b16 %v278
        %v352 = vunpack.c.l.b16 %v279
        %v353 = vunpack.c.l.b16 %v280
        %v354 = vunpack.c.l.b16 %v281
        %v355 = vunpack.c.l.b16 %v282
        %v356 = vunpack.c.l.b16 %v283
        %v357 = vunpack.c.l.b16 %v284
        %v358 = vunpack.c.l.b16 %v285
        %v359 = vunpack.c.l.b16 %v286
        %v360 = vunpack.c.l.b16 %v287
        %v361 = vunpack.c.l.b16 %v288
        %v362 = vunpack.c.l.b16 %v289
        %v363 = vunpack.c.l.b16 %v290
        %v364 = vunpack.c.l.b16 %v291
        %v365 = vpack.c.b16 %v334, %v333
        %v366 = vpack.c.b16 %v336, %v335
        %v367 = vpack.c.b16 %v338, %v337
        %v368 = vpack.c.b16 %v340, %v339
        %v369 = vpack.c.b16 %v342, %v341
        %v370 = vpack.c.b16 %v344, %v343
        %v371 = vpack.c.b16 %v346, %v345
        %v372 = vpack.c.b16 %v348, %v347
        %v373 = vpack.c.b16 %v350, %v349
        %v374 = vpack.c.b16 %v352, %v351
        %v375 = vpack.c.b16 %v354, %v353
        %v376 = vpack.c.b16 %v356, %v355
        %v377 = vpack.c.b16 %v358, %v357
        %v378 = vpack.c.b16 %v360, %v359
        %v379 = vpack.c.b16 %v362, %v361
        %v380 = vpack.c.b16 %v364, %v363
        %v386 = vunpack.c.l.b16 %v292
        %v387 = vunpack.c.l.b16 %v293
        %v388 = vunpack.c.l.b16 %v294
        %v389 = vunpack.c.l.b16 %v295
        %v390 = vunpack.c.l.b16 %v296
        %v391 = vpack.c.b16 %v387, %v386
        %v392 = vpack.c.b16 %v389, %v388
        %v393 = vpack.c.b16 %v390, %v390
        %vm396 = vcmask 293888
        %v398 = vsel %vm396, %v365, 0
        %v401 = vsel %vm396, %v366, 0
        %v404 = vsel %vm396, %v367, 0
        %v407 = vsel %vm396, %v368, 0
        %v410 = vsel %vm396, %v369, 0
        %v413 = vsel %vm396, %v370, 0
        %v416 = vsel %vm396, %v371, 0
        %v419 = vsel %vm396, %v372, 0
        %v422 = vsel %vm396, %v373, 0
        %v425 = vsel %vm396, %v374, 0
        %v428 = vsel %vm396, %v375, 0
        %v431 = vsel %vm396, %v376, 0
        %v434 = vsel %vm396, %v377, 0
        %v437 = vsel %vm396, %v378, 0
        %v440 = vsel %vm396, %v379, 0
        %v443 = vsel %vm396, %v380, 0
        %vm445 = vcmask 1041408
        %v447 = vsel %vm445, %v393, 0
        %449 = vmatpush.bf16.msra.mxu0 0
        %450 = vmatpush.bf16.msra.mxu0 0
        %451 = vmatpush.bf16.msra.mxu0 0
        %452 = vmatpush.bf16.msra.mxu0 0
        %453 = vmatpush.bf16.msra.mxu0 0
        %454 = vmatpush.bf16.msra.mxu0 %v447
        %455 = vmatpush.bf16.msra.mxu0 %v392
        %456 = vmatpush.bf16.msra.mxu0 %v391
        %457 = vmatmul.bf16.gmra.mxu0 %v398
        %v458 = vpop.f32.mrf.mxu0
        %v459 = vadd.f32 %v299, %v458
        %v460 = vpop.f32.mrf.mxu0
        %v461 = vadd.f32 %v299, %v460
        %462 = vmatmul.bf16.gmra.mxu0 %v401
        %v463 = vpop.f32.mrf.mxu0
        %v464 = vadd.f32 %v299, %v463
        %v465 = vpop.f32.mrf.mxu0
        %v466 = vadd.f32 %v299, %v465
        %467 = vmatmul.bf16.gmra.mxu0 %v404
        %v468 = vpop.f32.mrf.mxu0
        %v469 = vadd.f32 %v299, %v468
        %v470 = vpop.f32.mrf.mxu0
        %v471 = vadd.f32 %v299, %v470
        %472 = vmatmul.bf16.gmra.mxu0 %v407
        %v473 = vpop.f32.mrf.mxu0
        %v474 = vadd.f32 %v299, %v473
        %v475 = vpop.f32.mrf.mxu0
        %v476 = vadd.f32 %v299, %v475
        %477 = vmatmul.bf16.gmra.mxu0 %v410
        %v478 = vpop.f32.mrf.mxu0
        %v479 = vadd.f32 %v299, %v478
        %v480 = vpop.f32.mrf.mxu0
        %v481 = vadd.f32 %v299, %v480
        %482 = vmatmul.bf16.gmra.mxu0 %v413
        %v483 = vpop.f32.mrf.mxu0
        %v484 = vadd.f32 %v299, %v483
        %v485 = vpop.f32.mrf.mxu0
        %v486 = vadd.f32 %v299, %v485
        %487 = vmatmul.bf16.gmra.mxu0 %v416
        %v488 = vpop.f32.mrf.mxu0
        %v489 = vadd.f32 %v299, %v488
        %v490 = vpop.f32.mrf.mxu0
        %v491 = vadd.f32 %v299, %v490
        %492 = vmatmul.bf16.gmra.mxu0 %v419
        %v493 = vpop.f32.mrf.mxu0
        %v494 = vadd.f32 %v299, %v493
        %v495 = vpop.f32.mrf.mxu0
        %v496 = vadd.f32 %v299, %v495
        %497 = vmatmul.bf16.gmra.mxu0 %v422
        %v498 = vpop.f32.mrf.mxu0
        %v499 = vadd.f32 %v299, %v498
        %v500 = vpop.f32.mrf.mxu0
        %v501 = vadd.f32 %v299, %v500
        %502 = vmatmul.bf16.gmra.mxu0 %v425
        %v503 = vpop.f32.mrf.mxu0
        %v504 = vadd.f32 %v299, %v503
        %v505 = vpop.f32.mrf.mxu0
        %v506 = vadd.f32 %v299, %v505
        %507 = vmatmul.bf16.gmra.mxu0 %v428
        %v508 = vpop.f32.mrf.mxu0
        %v509 = vadd.f32 %v299, %v508
        %v510 = vpop.f32.mrf.mxu0
        %v511 = vadd.f32 %v299, %v510
        %512 = vmatmul.bf16.gmra.mxu0 %v431
        %v513 = vpop.f32.mrf.mxu0
        %v514 = vadd.f32 %v299, %v513
        %v515 = vpop.f32.mrf.mxu0
        %v516 = vadd.f32 %v299, %v515
        %517 = vmatmul.bf16.gmra.mxu0 %v434
        %v518 = vpop.f32.mrf.mxu0
        %v519 = vadd.f32 %v299, %v518
        %v520 = vpop.f32.mrf.mxu0
        %v521 = vadd.f32 %v299, %v520
        %522 = vmatmul.bf16.gmra.mxu0 %v437
        %v523 = vpop.f32.mrf.mxu0
        %v524 = vadd.f32 %v299, %v523
        %v525 = vpop.f32.mrf.mxu0
        %v526 = vadd.f32 %v299, %v525
        %527 = vmatmul.bf16.gmra.mxu0 %v440
        %v528 = vpop.f32.mrf.mxu0
        %v529 = vadd.f32 %v299, %v528
        %v530 = vpop.f32.mrf.mxu0
        %v531 = vadd.f32 %v299, %v530
        %532 = vmatmul.bf16.gmra.mxu0 %v443
        %v533 = vpop.f32.mrf.mxu0
        %v534 = vadd.f32 %v299, %v533
        %v535 = vpop.f32.mrf.mxu0
        %v536 = vadd.f32 %v299, %v535
        %537 = vdwg.mxu0
        %v538 = vmax.f32 %v459, 0.0
        %v539 = vmax.f32 %v461, 0.0
        %v540 = vmax.f32 %v464, 0.0
        %v541 = vmax.f32 %v466, 0.0
        %v542 = vmax.f32 %v469, 0.0
        %v543 = vmax.f32 %v471, 0.0
        %v544 = vmax.f32 %v474, 0.0
        %v545 = vmax.f32 %v476, 0.0
        %v546 = vmax.f32 %v479, 0.0
        %v547 = vmax.f32 %v481, 0.0
        %v548 = vmax.f32 %v484, 0.0
        %v549 = vmax.f32 %v486, 0.0
        %v550 = vmax.f32 %v489, 0.0
        %v551 = vmax.f32 %v491, 0.0
        %v552 = vmax.f32 %v494, 0.0
        %v553 = vmax.f32 %v496, 0.0
        %v554 = vmax.f32 %v499, 0.0
        %v555 = vmax.f32 %v501, 0.0
        %v556 = vmax.f32 %v504, 0.0
        %v557 = vmax.f32 %v506, 0.0
        %v558 = vmax.f32 %v509, 0.0
        %v559 = vmax.f32 %v511, 0.0
        %v560 = vmax.f32 %v514, 0.0
        %v561 = vmax.f32 %v516, 0.0
        %v562 = vmax.f32 %v519, 0.0
        %v563 = vmax.f32 %v521, 0.0
        %v564 = vmax.f32 %v524, 0.0
        %v565 = vmax.f32 %v526, 0.0
        %v566 = vmax.f32 %v529, 0.0
        %v567 = vmax.f32 %v531, 0.0
        %v568 = vmax.f32 %v534, 0.0
        %v569 = vmax.f32 %v536, 0.0
        %vm570 = vcmask 261120
        %v571 = vsel %vm570, %v538, 0.0
        %v572 = vsel %vm570, %v540, 0.0
        %v573 = vadd.f32 %v571, %v572
        %v574 = vsel %vm570, %v542, 0.0
        %v575 = vadd.f32 %v573, %v574
        %v576 = vsel %vm570, %v544, 0.0
        %v577 = vadd.f32 %v575, %v576
        %v578 = vsel %vm570, %v546, 0.0
        %v579 = vadd.f32 %v577, %v578
        %v580 = vsel %vm570, %v548, 0.0
        %v581 = vadd.f32 %v579, %v580
        %v582 = vsel %vm570, %v550, 0.0
        %v583 = vadd.f32 %v581, %v582
        %v584 = vsel %vm570, %v552, 0.0
        %v585 = vadd.f32 %v583, %v584
        %v586 = vsel %vm570, %v554, 0.0
        %v587 = vadd.f32 %v585, %v586
        %v588 = vsel %vm570, %v556, 0.0
        %v589 = vadd.f32 %v587, %v588
        %v590 = vsel %vm570, %v558, 0.0
        %v591 = vadd.f32 %v589, %v590
        %v592 = vsel %vm570, %v560, 0.0
        %v593 = vadd.f32 %v591, %v592
        %v594 = vsel %vm570, %v562, 0.0
        %v595 = vadd.f32 %v593, %v594
        %v596 = vsel %vm570, %v564, 0.0
        %v597 = vadd.f32 %v595, %v596
        %v598 = vsel %vm570, %v566, 0.0
        %v599 = vadd.f32 %v597, %v598
        %v600 = vsel %vm570, %v568, 0.0
        %v601 = vadd.f32 %v599, %v600
        %v602 = vsel %vm570, %v539, 0.0
        %v603 = vsel %vm570, %v541, 0.0
        %v604 = vadd.f32 %v602, %v603
        %v605 = vsel %vm570, %v543, 0.0
        %v606 = vadd.f32 %v604, %v605
        %v607 = vsel %vm570, %v545, 0.0
        %v608 = vadd.f32 %v606, %v607
        %v609 = vsel %vm570, %v547, 0.0
        %v610 = vadd.f32 %v608, %v609
        %v611 = vsel %vm570, %v549, 0.0
        %v612 = vadd.f32 %v610, %v611
        %v613 = vsel %vm570, %v551, 0.0
        %v614 = vadd.f32 %v612, %v613
        %v615 = vsel %vm570, %v553, 0.0
        %v616 = vadd.f32 %v614, %v615
        %v617 = vsel %vm570, %v555, 0.0
        %v618 = vadd.f32 %v616, %v617
        %v619 = vsel %vm570, %v557, 0.0
        %v620 = vadd.f32 %v618, %v619
        %v621 = vsel %vm570, %v559, 0.0
        %v622 = vadd.f32 %v620, %v621
        %v623 = vsel %vm570, %v561, 0.0
        %v624 = vadd.f32 %v622, %v623
        %v625 = vsel %vm570, %v563, 0.0
        %v626 = vadd.f32 %v624, %v625
        %v627 = vsel %vm570, %v565, 0.0
        %v628 = vadd.f32 %v626, %v627
        %v629 = vsel %vm570, %v567, 0.0
        %v630 = vadd.f32 %v628, %v629
        %v631 = vsel %vm570, %v569, 0.0
        %v632 = vadd.f32 %v630, %v631
        %v633 = vrcp.pop 16.0
        %v634 = vmul.f32 16.0, %v633
        %v635 = vsub.f32 1.0, %v634
        %v636 = vmul.f32 %v633, %v635
        %v637 = vadd.f32 %v633, %v636
        %vm638 = vweird.f32 %v633
        %v639 = vsel %vm638, %v633, %v637
        %v640 = vmul.f32 %v601, %v639
        %v641 = vmul.f32 %v632, %v639
        %v642 = vpack.c.bf16 %v641, %v640
        %v643 = vld [vmem:[%s3] sm:$0xf]
        %v644 = vld [vmem:[%s3 + $0x4] sm:$0xf]
        %v645 = vld [vmem:[%s3 + $0x8] sm:$0xf]
        %v646 = vld [vmem:[%s3 + $0xc] sm:$0xf]
        %v647 = vld [vmem:[%s4] sm:$0x1]
        %v649 = vperm.slane %v647, 0
        %v655 = vunpack.c.l.b16 %v643
        %v656 = vunpack.c.l.b16 %v644
        %v657 = vunpack.c.l.b16 %v645
        %v658 = vunpack.c.l.b16 %v646
        %v659 = vpack.c.b16 %v656, %v655
        %v660 = vpack.c.b16 %v658, %v657
        %v664 = vsel %vm570, %v642, 0
        %666 = vmatpush.bf16.msra.mxu0 0
        %667 = vmatpush.bf16.msra.mxu0 0
        %668 = vmatpush.bf16.msra.mxu0 0
        %669 = vmatpush.bf16.msra.mxu0 0
        %670 = vmatpush.bf16.msra.mxu0 0
        %671 = vmatpush.bf16.msra.mxu0 0
        %672 = vmatpush.bf16.msra.mxu0 %v660
        %673 = vmatpush.bf16.msra.mxu0 %v659
        %674 = vmatmul.bf16.gmra.mxu0 %v664
        %v675 = vpop.f32.mrf.mxu0
        %v676 = vadd.f32 %v649, %v675
        %v677 = vpop.f32.mrf.mxu0
        %v678 = vadd.f32 %v649, %v677
        %679 = vdwg.mxu0
        %680 = vmax.xlane.f32.xlu0 %v676
        %v681 = vpop.xlane.xlu0 %680
        %682 = vmax.xlane.f32.xlu0 %v678
        %v683 = vpop.xlane.xlu0 %682
        %v684 = vsub.f32 %v676, %v681
        %v685 = vsub.f32 %v678, %v683
        %v686 = vmul.f32 %v684, 1.442695
        %v687 = vpow.pop %v686
        %v688 = vmul.f32 %v685, 1.442695
        %v689 = vpow.pop %v688
        %690 = vadd.xlane.f32.xlu0 %v687
        %v691 = vpop.xlane.xlu0 %690
        %692 = vadd.xlane.f32.xlu0 %v689
        %v693 = vpop.xlane.xlu0 %692
        %v694 = vrcp.pop %v691
        %v695 = vmul.f32 %v691, %v694
        %v696 = vsub.f32 1.0, %v695
        %v697 = vmul.f32 %v694, %v696
        %v698 = vadd.f32 %v694, %v697
        %vm699 = vweird.f32 %v691
        %vm700 = vweird.f32 %v694
        %vm701 = vmor %vm699, %vm700
        %v702 = vsel %vm701, %v694, %v698
        %v703 = vand.u32 2147483647, %v691
        %vm704 = vcmp.eq.f32.partialorder %v703, 8.507059e+37
        %v705 = vand.u32 %v691, 2147483648
        %v706 = vor.u32 1.1754944e-38, %v705
        %v707 = vsel %vm704, %v706, %v702
        %v708 = vmul.f32 1.0, %v707
        %v709 = vrcp.pop %v693
        %v710 = vmul.f32 %v693, %v709
        %v711 = vsub.f32 1.0, %v710
        %v712 = vmul.f32 %v709, %v711
        %v713 = vadd.f32 %v709, %v712
        %vm714 = vweird.f32 %v693
        %vm715 = vweird.f32 %v709
        %vm716 = vmor %vm714, %vm715
        %v717 = vsel %vm716, %v709, %v713
        %v718 = vand.u32 2147483647, %v693
        %vm719 = vcmp.eq.f32.partialorder %v718, 8.507059e+37
        %v720 = vand.u32 %v693, 2147483648
        %v721 = vor.u32 1.1754944e-38, %v720
        %v722 = vsel %vm719, %v721, %v717
        %v723 = vmul.f32 1.0, %v722
        %v724 = vlaneseq
        %v725 = vand.u32 %v724, 127
        %vm726 = vcmp.eq.f32.partialorder %v676, %v681
        %vm727 = vcmp.eq.f32.partialorder %v678, %v683
        %v728 = vsel %vm726, %v725, 128
        %v729 = vsel %vm727, %v725, 128
        %v730 = vand.u32 %v728, 65535
        %v731 = vshra.s32 %v728, 16
        %v732 = vcvt.s32.f32 %v730
        %v733 = vcvt.s32.f32 %v731
        %734 = vmin.xlane.f32.xlu0 %v733
        %v735 = vpop.xlane.xlu0 %734
        %vm736 = vcmp.eq.f32.partialorder %v733, %v735
        %v737 = vsel %vm736, %v732, inf
        %738 = vmin.xlane.f32.xlu0 %v737
        %v739 = vpop.xlane.xlu0 %738
        %v740 = vcvt.f32.s32 %v739
        %v741 = vcvt.f32.s32 %v735
        %v742 = vshll.u32 %v741, 16
        %v743 = vadd.s32 %v742, %v740
        %v744 = vand.u32 %v729, 65535
        %v745 = vshra.s32 %v729, 16
        %v746 = vcvt.s32.f32 %v744
        %v747 = vcvt.s32.f32 %v745
        %748 = vmin.xlane.f32.xlu0 %v747
        %v749 = vpop.xlane.xlu0 %748
        %vm750 = vcmp.eq.f32.partialorder %v747, %v749
        %v751 = vsel %vm750, %v746, inf
        %752 = vmin.xlane.f32.xlu0 %v751
        %v753 = vpop.xlane.xlu0 %752
        %v754 = vcvt.f32.s32 %v753
        %v755 = vcvt.f32.s32 %v749
        %v756 = vshll.u32 %v755, 16
        %v757 = vadd.s32 %v756, %v754
        %v758 = vperm.slane %v743, %v725
        %v759 = vadd.s32 %v725, 4294967288
        %v760 = vperm.slane %v757, %v759
        %vm761 = vcmask 130112
        %v762 = vsel %vm761, %v760, %v758
        %vm763 = vcmask 130048
        %v764 = vsel %vm763, %v762, 0
        %v767 = vperm.slane %v708, %v725
        %v768 = vperm.slane %v723, %v759
        %v769 = vsel %vm761, %v768, %v767
        %v771 = vsel %vm763, %v769, 0.0
        %772 = vst [vmem:[%s247] sm:$0x1] %v764
        %773 = vst [vmem:[%s253] sm:$0x1] %v771
        %s774 = sand.u32 %s142, 1
        %s775 = scalar_lea.sflag [#allocation3], %s774
        %s776 = sand.u32 %s142, 1
        %s777 = scalar_lea.vmem [#allocation2], %s776
        %s778 = sand.u32 %s168, 1
        %s779 = scalar_lea.sflag [#allocation5], %s778
        %s780 = sand.u32 %s168, 1
        %s781 = scalar_lea.vmem [#allocation4], %s780
        // Predicated region
        $region41: #{model_forward.1} parent=39 // pred_check
          %p782 = pneg %p152
        $region42: #{model_forward.1} parent=39 // pred_check_branch
          %784 = sbr.rel (%p782) target = $region44
        $region43: #{model_forward.1} parent=39 // pred_region
          %786 = vsyncadd %s775, 0
          %s787 = scalar_lea.hbm %s5, %s24
          %s789 = sshll.u32 %s777, 4
          %s790 = int_to_ptr.vmem [resolvable:$true] %s789
          %s791 = sshll.u32 %s787, 4
          %s792 = int_to_ptr.hbm [resolvable:$true] %s791
          %794 = dma.vmem_to_hbm [thread:$0]  %s790, 16, %s792, %s775
        $region44: #{model_forward.1} parent=39 // pred_fallthru
          _
        // Predicated region
        $region45: #{model_forward.1} parent=39 // pred_check
          %p795 = pneg %p178
        $region46: #{model_forward.1} parent=39 // pred_check_branch
          %797 = sbr.rel (%p795) target = $region48
        $region47: #{model_forward.1} parent=39 // pred_region
          %799 = vsyncadd %s779, 0
          %s800 = scalar_lea.hbm %s6, %s24
          %s802 = sshll.u32 %s781, 4
          %s803 = int_to_ptr.vmem [resolvable:$true] %s802
          %s804 = sshll.u32 %s800, 4
          %s805 = int_to_ptr.hbm [resolvable:$true] %s804
          %807 = dma.vmem_to_hbm [thread:$0]  %s803, 16, %s805, %s779
        $region48: #{model_forward.1} parent=39 // pred_fallthru
          _
      $region40: #{model_forward.1} parent=5 // pred_fallthru
        _
      %p808 = scmp.le.s32.totalorder 2, %s19
      // Predicated region
      $region49: #{model_forward.1} parent=5 // pred_check
        %p809 = pneg %p808
      $region50: #{model_forward.1} parent=5 // pred_check_branch
        %811 = sbr.rel (%p809) target = $region52
      $region51: #{model_forward.1} parent=5 // pred_region
        %s812 = ssub.s32 %s19, 2
        // Predicated region
        $region53: #{model_forward.1} parent=51 // pred_check
          %p813 = pneg %p158
        $region54: #{model_forward.1} parent=51 // pred_check_branch
          %815 = sbr.rel (%p813) target = $region56
        $region55: #{model_forward.1} parent=51 // pred_region
          %s816 = sand.u32 %s143, 1
          %s817 = scalar_lea.sflag [#allocation3], %s816
          %s818 = sand.u32 %s143, 1
          %s819 = scalar_lea.vmem [#allocation2], %s818
          %821 = dma.done %s817, 16
        $region56: #{model_forward.1} parent=51 // pred_fallthru
          _
        // Predicated region
        $region57: #{model_forward.1} parent=51 // pred_check
          %p822 = pneg %p184
        $region58: #{model_forward.1} parent=51 // pred_check_branch
          %824 = sbr.rel (%p822) target = $region60
        $region59: #{model_forward.1} parent=51 // pred_region
          %s825 = sand.u32 %s169, 1
          %s826 = scalar_lea.sflag [#allocation5], %s825
          %s827 = sand.u32 %s169, 1
          %s828 = scalar_lea.vmem [#allocation4], %s827
          %830 = dma.done %s826, 16
        $region60: #{model_forward.1} parent=51 // pred_fallthru
          _
      $region52: #{model_forward.1} parent=5 // pred_fallthru
        _
    $region6: #{model_forward.1} parent=1 // loop_footer
      %s23 = sadd.s32 1, %s19
    $region7: #{model_forward.1} parent=1 // loop_footer_branch
      %18 = sbr.rel target = $region3
    $region8: #{model_forward.1} parent=1 // loop_exit
      _
    %831 = vsyncpa [#allocation3], 1
    %s832 = scalar_lea.sflag [#allocation3], 1
    %833 = vsyncpa %s832, 1
    %834 = vsyncpa [#allocation5], 1
    %s835 = scalar_lea.sflag [#allocation5], 1
    %836 = vsyncpa %s835, 1

</llo_original>
